<compile_context>
chip_gen: v5e
topology: v5e:2x2
jax: 0.10.0
libtpu: 0.0.40
codegen_flags: <defaults>
</compile_context>

<pallas_src>
import jax
import jax.numpy as jnp
from jax.experimental import pallas as pl
from jax.experimental.pallas import tpu as pltpu


# ----------------------------- kernel -------------------------------------- #

def _make_ffn_kernel(resident, th):
    def kernel(x_ref, w1_ref, b1_ref, w2_ref, b2_ref, o_ref, acc_ref):
        # x_ref:  (tm, C)
        # resident: w1_ref (C, H), b1_ref (1, H), w2_ref (H, C)   (sliced by th)
        # streamed: w1_ref (C, th), b1_ref (1, th), w2_ref (th, C)
        # b2_ref: (1, C)   o_ref: (tm, C)   acc_ref: (tm, C) f32
        h_idx = pl.program_id(1)

        @pl.when(h_idx == 0)
        def _init():
            acc_ref[...] = jnp.zeros_like(acc_ref)

        if resident:
            off = pl.multiple_of(h_idx * th, th)
            w1 = w1_ref[:, pl.ds(off, th)]
            b1 = b1_ref[:, pl.ds(off, th)]
            w2 = w2_ref[pl.ds(off, th), :]
        else:
            w1 = w1_ref[...]
            b1 = b1_ref[...]
            w2 = w2_ref[...]

        # First linear (canonical [M,K]x[K,N]) + bias + ReLU, f32 accumulation.
        h = jnp.dot(x_ref[...], w1, preferred_element_type=jnp.float32)
        h = jnp.maximum(h + b1, 0.0)

        # Partial second linear, accumulated over the hidden-block axis.
        acc_ref[...] += jnp.dot(h.astype(w2.dtype), w2,
                                preferred_element_type=jnp.float32)

        @pl.when(h_idx == pl.num_programs(1) - 1)
        def _finalize():
            o_ref[...] = (acc_ref[...] + b2_ref[...]).astype(o_ref.dtype)

    return kernel


# --------------------------- tiling helpers --------------------------------- #

def _round_up(n, m):
    return ((n + m - 1) // m) * m


def _largest_divisor_le(n, cap, align):
    c = min(cap, n)
    c -= c % align
    while c >= align:
        if n % c == 0:
            return c
        c -= align
    return None


def _vmem_budget_bytes():
    cap = None
    try:
        info = pltpu.get_tpu_info()
        cap = int(getattr(info, "vmem_capacity_bytes", 0)) or None
    except Exception:
        cap = None
    if cap is None:
        cap = 64 << 20            # conservative fallback: v7x per-TensorCore VMEM
    return int(cap * 0.70)        # leave headroom for compiler-internal scratch


def _vmem_bytes(tm, th, resident, C, H, c_size, o_size):
    # Lane (last-dim) padding to 128; (1, n) bias blocks pad to 8 sublanes; f32.
    Cl = _round_up(C, 128)
    Hl = _round_up(H, 128)
    thl = _round_up(th, 128)
    if resident:
        w = 2 * (C * Hl + H * Cl) * c_size          # double-buffer accounting
        b = 2 * 8 * (Hl + Cl) * 4
    else:
        w = 2 * (C * thl + th * Cl) * c_size
        b = 2 * 8 * (thl + Cl) * 4
    x_b = 2 * tm * Cl * c_size
    o_b = 2 * tm * Cl * o_size
    acc = tm * Cl * 4
    return w + b + x_b + o_b + acc


# ------------------------------ wrapper ------------------------------------- #

def feed_forward3(x, w1, b1, w2, b2, *, tile_m=1024, tile_h=512,
                  compute_dtype=jnp.bfloat16, weights_resident=None,
                  weight_buffers=2, vmem_budget_bytes=None):
    """x: (B,T,C); w1: (4C,C); b1: (4C,); w2: (C,4C); b2: (C,)  (PyTorch layout).

    Returns relu(x @ w1.T + b1) @ w2.T + b2  (dropout = identity / eval mode).
    compute_dtype: MXU dtype (default bf16, f32 accumulation); None -> x.dtype.
    """
    B, T, C = x.shape
    H = w1.shape[0]
    assert w1.shape == (H, C) and w2.shape == (C, H)
    assert b1.shape == (H,) and b2.shape == (C,)

    out_dtype = jnp.dtype(x.dtype)
    cdt = jnp.dtype(compute_dtype) if compute_dtype is not None else out_dtype

    M = B * T
    x2 = x.reshape(M, C).astype(cdt)
    # One-time HBM-side transpose to canonical [K,N] layout (amortized over all
    # grid steps).  If params are stored pre-transposed in `cdt`, this is free.
    w1t = w1.T.astype(cdt)                     # (C, H)
    w2t = w2.T.astype(cdt)                     # (H, C)
    b1r = b1.reshape(1, H).astype(jnp.float32)
    b2r = b2.reshape(1, C).astype(jnp.float32)

    budget = int(vmem_budget_bytes) if vmem_budget_bytes else _vmem_budget_bytes()

    # Hidden-dim block: prefer 256-multiples (v6e/v7x MXU columns), else 128,
    # else the full H.
    th = (_largest_divisor_le(H, tile_h, 256)
          or _largest_divisor_le(H, tile_h, 128)
          or H)

    # Weights VMEM-resident if the (double-buffered) weights fit comfortably.
    if weights_resident is None:
        resident = (4 * C * H * cdt.itemsize) <= int(0.6 * budget)
    else:
        resident = bool(weights_resident)

    # Row tile: a divisor of the sublane-padded M (no full-tile padding of x),
    # shrunk until the VMEM budget is met.
    sub = 16 if cdt == jnp.bfloat16 else 8
    Mp = _round_up(M, sub)                     # pad at most sub-1 rows (cheap)

    def pick_tm(res):
        cap = max(sub, min(tile_m, Mp) - (min(tile_m, Mp) % sub))
        t = _largest_divisor_le(Mp, cap, sub) or sub
        while t > sub and _vmem_bytes(t, th, res, C, H, cdt.itemsize,
                                      out_dtype.itemsize) > budget:
            t = _largest_divisor_le(Mp, max(sub, t // 2), sub) or sub
        return t

    tm = pick_tm(resident)
    if resident and _vmem_bytes(tm, th, resident, C, H, cdt.itemsize,
                                out_dtype.itemsize) > budget:
        resident = False                       # fall back to streamed weights
        tm = pick_tm(resident)

    # Give the "parallel" M axis >=2 tiles so both v7x TensorCores get work
    # (negligible overhead on single-TC v5e/v6e).
    if Mp // tm < 2:
        smaller = _largest_divisor_le(Mp, tm // 2, sub)
        if smaller:
            tm = smaller

    if Mp != M:
        x2 = jnp.pad(x2, ((0, Mp - M), (0, 0)))

    grid = (Mp // tm, H // th)
    n_row_tiles = grid[0]

    # BlockSpecs.
    if resident:
        w1_spec = pl.BlockSpec((C, H), lambda i, h: (0, 0))
        b1_spec = pl.BlockSpec((1, H), lambda i, h: (0, 0))
        w2_spec = pl.BlockSpec((H, C), lambda i, h: (0, 0))
    else:
        wkw = {}
        if weight_buffers and weight_buffers != 2:
            wkw["pipeline_mode"] = pl.Buffered(weight_buffers)   # e.g. 3 on v6e
        w1_spec = pl.BlockSpec((C, th), lambda i, h: (0, h), **wkw)
        b1_spec = pl.BlockSpec((1, th), lambda i, h: (0, h))
        w2_spec = pl.BlockSpec((th, C), lambda i, h: (h, 0), **wkw)
    b2_spec = pl.BlockSpec((1, C), lambda i, h: (0, 0))

    need = _vmem_bytes(tm, th, resident, C, H, cdt.itemsize, out_dtype.itemsize)
    vmem_limit = int(min(budget, max(16 << 20, int(need * 1.25) + (2 << 20))))

    w_passes = 1 if resident else n_row_tiles
    cost = pl.CostEstimate(
        flops=int(4 * M * C * H),
        transcendentals=0,
        bytes_accessed=int(M * C * cdt.itemsize            # x read
                           + M * C * out_dtype.itemsize    # out write
                           + w_passes * 2 * C * H * cdt.itemsize
                           + (H + C) * 4),                 # biases (f32)
    )

    out2 = pl.pallas_call(
        _make_ffn_kernel(resident, th),
        out_shape=jax.ShapeDtypeStruct((Mp, C), out_dtype),
        grid_spec=pltpu.PrefetchScalarGridSpec(
            num_scalar_prefetch=0,
            grid=grid,
            in_specs=[
                pl.BlockSpec((tm, C), lambda i, h: (i, 0)),   # x rows
                w1_spec,                                      # W1^T (C,H)/(C,th)
                b1_spec,                                      # b1
                w2_spec,                                      # W2^T (H,C)/(th,C)
                b2_spec,                                      # b2
            ],
            out_specs=pl.BlockSpec((tm, C), lambda i, h: (i, 0)),
            scratch_shapes=[pltpu.VMEM((tm, C), jnp.float32)],
        ),
        compiler_params=pltpu.CompilerParams(
            dimension_semantics=("parallel", "arbitrary"),
            vmem_limit_bytes=vmem_limit,
        ),
        cost_estimate=cost,
    )(x2, w1t, b1r, w2t, b2r)

    return out2[:M].reshape(B, T, C)


# ----------------------------- reference ------------------------------------ #

def feed_forward3_ref(x, w1, b1, w2, b2, compute_dtype=None):
    """Mirrors the kernel's casting: inputs rounded to compute_dtype, f32 math."""
    hp = jax.lax.Precision.HIGHEST
    if compute_dtype is not None:
        x = x.astype(compute_dtype)
        w1 = w1.astype(compute_dtype)
        w2 = w2.astype(compute_dtype)
    xf, w1f, w2f = (a.astype(jnp.float32) for a in (x, w1, w2))
    h = jnp.maximum(jnp.einsum("btc,hc->bth", xf, w1f, precision=hp) + b1, 0.0)
    if compute_dtype is not None:
        h = h.astype(compute_dtype).astype(jnp.float32)
    return jnp.einsum("bth,ch->btc", h, w2f, precision=hp) + b2


# ------------------------------- main --------------------------------------- #

if __name__ == "__main__":
    B, T, C = 2, 8, 32
    H = 4 * C

    key = jax.random.PRNGKey(0)
    kx, kw1, kb1, kw2, kb2 = jax.random.split(key, 5)

    # nn.Linear default init: U(-1/sqrt(fan_in), 1/sqrt(fan_in))
    bound1 = 1.0 / jnp.sqrt(jnp.float32(C))
    bound2 = 1.0 / jnp.sqrt(jnp.float32(H))
    w1 = jax.random.uniform(kw1, (H, C), jnp.float32, -bound1, bound1)
    b1 = jax.random.uniform(kb1, (H,), jnp.float32, -bound1, bound1)
    w2 = jax.random.uniform(kw2, (C, H), jnp.float32, -bound2, bound2)
    b2 = jax.random.uniform(kb2, (C,), jnp.float32, -bound2, bound2)
    x = jax.random.normal(kx, (B, T, C), jnp.float32)

    ref_f32 = feed_forward3_ref(x, w1, b1, w2, b2)

    # 1) f32 compute path, streamed-weight branch (tight tolerance).
    out_f32 = jax.block_until_ready(
        feed_forward3(x, w1, b1, w2, b2,
                      compute_dtype=jnp.float32, weights_resident=False))
    assert out_f32.shape == (B, T, C) and out_f32.dtype == x.dtype
    assert jnp.allclose(out_f32, ref_f32, atol=2e-3, rtol=2e-3)

    # 2) Default path: bf16 MXU compute (f32 accumulation), VMEM-resident weights.
    #    Compared against a bf16-cast reference (tighter bound than vs. pure f32).
    ref_bf16 = feed_forward3_ref(x, w1, b1, w2, b2, compute_dtype=jnp.bfloat16)
    out_bf16 = jax.block_until_ready(feed_forward3(x, w1, b1, w2, b2))
    assert out_bf16.shape == (B, T, C) and out_bf16.dtype == x.dtype
    assert jnp.allclose(out_bf16, ref_bf16, atol=2e-2, rtol=2e-2)

    print("KERNEL_OK")
</pallas_src>

<mosaic_0001>
module attributes {stable_mosaic.version = 11 : i64} {
  func.func @kernel(%arg0: i32, %arg1: i32, %arg2: memref<8x32xf32, #tpu.memory_space<vmem>>, %arg3: memref<32x128xf32, #tpu.memory_space<vmem>>, %arg4: memref<1x128xf32, #tpu.memory_space<vmem>>, %arg5: memref<128x32xf32, #tpu.memory_space<vmem>>, %arg6: memref<1x32xf32, #tpu.memory_space<vmem>>, %arg7: memref<8x32xf32, #tpu.memory_space<vmem>>, %arg8: memref<8x32xf32, #tpu.memory_space<vmem>>) attributes {dimension_semantics = [#tpu.dimension_semantics<parallel>, #tpu.dimension_semantics<arbitrary>], iteration_bounds = array<i64: 2, 1>, scalar_prefetch = 0 : i64, scratch_operands = 1 : i64, tpu.core_type = #tpu.core_type<tc>, window_params = [{transform_indices = @transform_0, window_bounds = array<i64: 8, 32>}, {transform_indices = @transform_1, window_bounds = array<i64: 32, 128>}, {transform_indices = @transform_2, window_bounds = array<i64: 1, 128>}, {transform_indices = @transform_3, window_bounds = array<i64: 128, 32>}, {pipeline_mode = #tpu.pipeline_mode<synchronous>, transform_indices = @transform_4, window_bounds = array<i64: 1, 32>}, {transform_indices = @transform_5, window_bounds = array<i64: 8, 32>}]} {
    %c0_i32 = arith.constant 0 : i32
    %0 = arith.cmpi eq, %arg1, %c0_i32 : i32
    %1 = arith.extui %0 : i1 to i32
    %c0_i32_0 = arith.constant 0 : i32
    %2 = arith.cmpi ne, %1, %c0_i32_0 : i32
    scf.if %2 {
      %cst_16 = arith.constant 0.000000e+00 : f32
      %19 = vector.broadcast %cst_16 : f32 to vector<8x32xf32>
      %c0_17 = arith.constant 0 : index
      %c0_18 = arith.constant 0 : index
      %20 = vector.load %arg8[%c0_17, %c0_18] : memref<8x32xf32, #tpu.memory_space<vmem>>, vector<8x32xf32>
      tpu.vector_store %arg8[%c0_17, %c0_18], %19 {strides = array<i32>} : memref<8x32xf32, #tpu.memory_space<vmem>>, vector<8x32xf32>,
    } else {
    }
    %c0 = arith.constant 0 : index
    %c0_1 = arith.constant 0 : index
    %3 = vector.load %arg3[%c0, %c0_1] : memref<32x128xf32, #tpu.memory_space<vmem>>, vector<32x128xf32>
    %c0_2 = arith.constant 0 : index
    %c0_3 = arith.constant 0 : index
    %4 = vector.load %arg4[%c0_2, %c0_3] : memref<1x128xf32, #tpu.memory_space<vmem>>, vector<1x128xf32>
    %c0_4 = arith.constant 0 : index
    %c0_5 = arith.constant 0 : index
    %5 = vector.load %arg5[%c0_4, %c0_5] : memref<128x32xf32, #tpu.memory_space<vmem>>, vector<128x32xf32>
    %c0_6 = arith.constant 0 : index
    %c0_7 = arith.constant 0 : index
    %6 = vector.load %arg2[%c0_6, %c0_7] : memref<8x32xf32, #tpu.memory_space<vmem>>, vector<8x32xf32>
    %cst = arith.constant dense<0.000000e+00> : vector<8x128xf32>
    %7 = tpu.matmul %6, %3, %cst {dimension_numbers = #tpu.dot_dimension_numbers<[1], [0], [0], [1], [0, 0, 1, 1], [], []>} : vector<8x32xf32>, vector<32x128xf32>, vector<8x128xf32> -> vector<8x128xf32>
    %8 = vector.broadcast %4 : vector<1x128xf32> to vector<8x128xf32>
    %9 = arith.addf %7, %8 : vector<8x128xf32>
    %cst_8 = arith.constant 0.000000e+00 : f32
    %10 = vector.broadcast %cst_8 : f32 to vector<8x128xf32>
    %11 = arith.maximumf %9, %10 : vector<8x128xf32>
    %c0_9 = arith.constant 0 : index
    %c0_10 = arith.constant 0 : index
    %12 = vector.load %arg8[%c0_9, %c0_10] : memref<8x32xf32, #tpu.memory_space<vmem>>, vector<8x32xf32>
    %cst_11 = arith.constant dense<0.000000e+00> : vector<8x32xf32>
    %13 = tpu.matmul %11, %5, %cst_11 {dimension_numbers = #tpu.dot_dimension_numbers<[1], [0], [0], [1], [0, 0, 1, 1], [], []>} : vector<8x128xf32>, vector<128x32xf32>, vector<8x32xf32> -> vector<8x32xf32>
    %14 = arith.addf %12, %13 : vector<8x32xf32>
    %c0_12 = arith.constant 0 : index
    %c0_13 = arith.constant 0 : index
    %15 = vector.load %arg8[%c0_12, %c0_13] : memref<8x32xf32, #tpu.memory_space<vmem>>, vector<8x32xf32>
    tpu.vector_store %arg8[%c0_12, %c0_13], %14 {strides = array<i32>} : memref<8x32xf32, #tpu.memory_space<vmem>>, vector<8x32xf32>,
    %c0_i32_14 = arith.constant 0 : i32
    %16 = arith.cmpi eq, %arg1, %c0_i32_14 : i32
    %17 = arith.extui %16 : i1 to i32
    %c0_i32_15 = arith.constant 0 : i32
    %18 = arith.cmpi ne, %17, %c0_i32_15 : i32
    scf.if %18 {
      %c0_16 = arith.constant 0 : index
      %c0_17 = arith.constant 0 : index
      %19 = vector.load %arg8[%c0_16, %c0_17] : memref<8x32xf32, #tpu.memory_space<vmem>>, vector<8x32xf32>
      %c0_18 = arith.constant 0 : index
      %c0_19 = arith.constant 0 : index
      %20 = vector.load %arg6[%c0_18, %c0_19] : memref<1x32xf32, #tpu.memory_space<vmem>>, vector<1x32xf32>
      %21 = vector.broadcast %20 : vector<1x32xf32> to vector<8x32xf32>
      %22 = arith.addf %19, %21 : vector<8x32xf32>
      %c0_20 = arith.constant 0 : index
      %c0_21 = arith.constant 0 : index
      %23 = vector.load %arg7[%c0_20, %c0_21] : memref<8x32xf32, #tpu.memory_space<vmem>>, vector<8x32xf32>
      tpu.vector_store %arg7[%c0_20, %c0_21], %22 {strides = array<i32>} : memref<8x32xf32, #tpu.memory_space<vmem>>, vector<8x32xf32>,
    } else {
    }
    return
  }
  func.func @transform_0(%arg0: i32, %arg1: i32) -> (i32, i32) {
    %c0_i32 = arith.constant 0 : i32
    %c0_i32_0 = arith.constant 0 : i32
    return %arg0, %c0_i32 : i32, i32
  }
  func.func @transform_1(%arg0: i32, %arg1: i32) -> (i32, i32) {
    %c0_i32 = arith.constant 0 : i32
    %c0_i32_0 = arith.constant 0 : i32
    return %c0_i32, %arg1 : i32, i32
  }
  func.func @transform_2(%arg0: i32, %arg1: i32) -> (i32, i32) {
    %c0_i32 = arith.constant 0 : i32
    %c0_i32_0 = arith.constant 0 : i32
    return %c0_i32, %arg1 : i32, i32
  }
  func.func @transform_3(%arg0: i32, %arg1: i32) -> (i32, i32) {
    %c0_i32 = arith.constant 0 : i32
    %c0_i32_0 = arith.constant 0 : i32
    return %arg1, %c0_i32 : i32, i32
  }
  func.func @transform_4(%arg0: i32, %arg1: i32) -> (i32, i32) {
    %c0_i32 = arith.constant 0 : i32
    %c0_i32_0 = arith.constant 0 : i32
    %c0_i32_1 = arith.constant 0 : i32
    return %c0_i32, %c0_i32_0 : i32, i32
  }
  func.func @transform_5(%arg0: i32, %arg1: i32) -> (i32, i32) {
    %c0_i32 = arith.constant 0 : i32
    %c0_i32_0 = arith.constant 0 : i32
    return %arg0, %c0_i32 : i32, i32
  }
}

</mosaic_0001>

<llo_original>
// kernel: tpu_custom_call.1
$region0: #{tpu_custom_call.1}
  #allocation0 [shape = 'u32[]', space=smem, size = 0x4, offset = 0x4, fixed_abs, tag = 'smem constant byte address 0x4 - core index']
  #allocation1 [shape = 'u32[72,128]{1,0:T(1,128)}', space=vmem, size = 0x9000, scoped, tag = 'internal scratch']
  #allocation2 [shape = 'f32[8,32]{1,0:T(8,128)}', space=vmem, size = 0x1000, scoped, tag = 'scratch operand']
  %s0 = inlined_call_operand.vmem [shape: f32[16,32], index: 0, kind: input, shape index: {}]
  %s1 = inlined_call_operand.vmem [shape: f32[32,128], index: 1, kind: input, shape index: {}]
  %s2 = inlined_call_operand.vmem [shape: f32[1,128], index: 2, kind: input, shape index: {}]
  %s3 = inlined_call_operand.vmem [shape: f32[128,32], index: 3, kind: input, shape index: {}]
  %s4 = inlined_call_operand.vmem [shape: f32[1,32], index: 4, kind: input, shape index: {}]
  %s5 = inlined_call_operand.hbm [shape: f32[16,32], index: 5, kind: output, shape index: {}]
  %s6 = sld [smem:[#allocation0]]
  $region61: #{tpu_custom_call.1} parent=0
    _
  %s8 = ssub.s32 1, %s6
  %s9 = scalar_select 0, %s8, %s6
  $region1: #{tpu_custom_call.1} parent=0
    #allocation3 [shape = 'u8[8192]{0}', space=vmem, size = 0x2000, scoped, tag = 'output window, operand 0']
    #allocation4 [shape = 's32[2]{0}', space=sflag, size = 0x8, scoped, tag = 'scoped memory for tpu_custom_call.1']
    %10 = vsyncpa [#allocation4], 0
    %s11 = scalar_lea.sflag [#allocation4], 1
    %12 = vsyncpa %s11, 0
    loop: start=0, step=1, limit=4
    $region2: #{tpu_custom_call.1} parent=1 // loop_pre_header
      _
    $region3: #{tpu_custom_call.1} parent=1 // loop_header
      %s14 = sphi 0, %s18
      %p15 = scmp.ge.s32.totalorder %s14, 4
      %s21 = sphi 0, %s33
      %s22 = sphi 0, %s29
      %s23 = sphi 0, %s21
      %s24 = sphi 0, %s22
      %s25 = sphi 0, %s23
      %s26 = sphi 0, %s24
      %s36 = sphi 0, %s38
      %s39 = sphi 0, %s36
      %s40 = sphi 0, %s39
      %s56 = sphi 0, %s40
      %s62 = sphi 0, %s64
      %s65 = sphi 0, %s62
      %s66 = sphi 0, %s65
      %s82 = sphi 0, %s66
      %s88 = sphi 0, %s90
      %s91 = sphi 0, %s88
      %s92 = sphi 0, %s91
      %s108 = sphi 0, %s92
      %s114 = sphi 0, %s116
      %s117 = sphi 0, %s114
      %s118 = sphi 0, %s117
      %s134 = sphi 0, %s118
      %s138 = sphi 0, %s138
      %s140 = sphi 0, %s138
      %s141 = sphi 0, %s140
      %s155 = sphi 0, %s141
      %s161 = sphi 0, %s163
      %s164 = sphi 0, %s161
      %s165 = sphi 0, %s164
      %s181 = sphi 0, %s165
    $region4: #{tpu_custom_call.1} parent=1 // loop_header_branch
      %17 = sbr.rel (%p15) target = $region8
    $region5: #{tpu_custom_call.1} parent=1 // loop_body
      %s19 = ssub.s32 %s14, 1
      %s20 = ssub.s32 %s14, 2
      %s27 = sadd.s32 1, %s22
      %p28 = scmp.ge.s32.totalorder %s27, 1
      %s29 = scalar_select %p28, 0, %s27
      %s30 = sadd.s32 1, %s21
      %s31 = scalar_select %p28, %s30, %s21
      %p32 = scmp.ge.s32.totalorder %s31, 2
      %s33 = scalar_select %p32, 0, %s31
      %s34 = ssub.s32 %s21, %s33
      %p35 = scmp.eq.s32.totalorder %s34, 0
      %s37 = sadd.s32 %s36, 1
      %s38 = scalar_select %p35, %s36, %s37
      %p41 = pneg %p35
      %p42 = scmp.eq.s32.totalorder %s14, 1
      %p43 = por %p41, %p42
      %p44 = scmp.ne.s32.totalorder %s36, %s39
      %p45 = scmp.eq.s32.totalorder %s14, 0
      %p46 = por %p44, %p45
      %p47 = scmp.ne.s32.totalorder %s36, %s39
      %p48 = scmp.eq.s32.totalorder %s19, 1
      %p49 = por %p47, %p48
      %p50 = scmp.ne.s32.totalorder %s39, %s40
      %p51 = scmp.eq.s32.totalorder %s19, 0
      %p52 = por %p50, %p51
      %p53 = scmp.ne.s32.totalorder %s39, %s40
      %p54 = scmp.eq.s32.totalorder %s20, 1
      %p55 = por %p53, %p54
      %p57 = scmp.ne.s32.totalorder %s40, %s56
      %p58 = scmp.eq.s32.totalorder %s20, 0
      %p59 = por %p57, %p58
      %s60 = ssub.s32 %s22, %s29
      %p61 = scmp.eq.s32.totalorder %s60, 0
      %s63 = sadd.s32 %s62, 1
      %s64 = scalar_select %p61, %s62, %s63
      %p67 = pneg %p61
      %p68 = scmp.eq.s32.totalorder %s14, 1
      %p69 = por %p67, %p68
      %p70 = scmp.ne.s32.totalorder %s62, %s65
      %p71 = scmp.eq.s32.totalorder %s14, 0
      %p72 = por %p70, %p71
      %p73 = scmp.ne.s32.totalorder %s62, %s65
      %p74 = scmp.eq.s32.totalorder %s19, 1
      %p75 = por %p73, %p74
      %p76 = scmp.ne.s32.totalorder %s65, %s66
      %p77 = scmp.eq.s32.totalorder %s19, 0
      %p78 = por %p76, %p77
      %p79 = scmp.ne.s32.totalorder %s65, %s66
      %p80 = scmp.eq.s32.totalorder %s20, 1
      %p81 = por %p79, %p80
      %p83 = scmp.ne.s32.totalorder %s66, %s82
      %p84 = scmp.eq.s32.totalorder %s20, 0
      %p85 = por %p83, %p84
      %s86 = ssub.s32 %s22, %s29
      %p87 = scmp.eq.s32.totalorder %s86, 0
      %s89 = sadd.s32 %s88, 1
      %s90 = scalar_select %p87, %s88, %s89
      %p93 = pneg %p87
      %p94 = scmp.eq.s32.totalorder %s14, 1
      %p95 = por %p93, %p94
      %p96 = scmp.ne.s32.totalorder %s88, %s91
      %p97 = scmp.eq.s32.totalorder %s14, 0
      %p98 = por %p96, %p97
      %p99 = scmp.ne.s32.totalorder %s88, %s91
      %p100 = scmp.eq.s32.totalorder %s19, 1
      %p101 = por %p99, %p100
      %p102 = scmp.ne.s32.totalorder %s91, %s92
      %p103 = scmp.eq.s32.totalorder %s19, 0
      %p104 = por %p102, %p103
      %p105 = scmp.ne.s32.totalorder %s91, %s92
      %p106 = scmp.eq.s32.totalorder %s20, 1
      %p107 = por %p105, %p106
      %p109 = scmp.ne.s32.totalorder %s92, %s108
      %p110 = scmp.eq.s32.totalorder %s20, 0
      %p111 = por %p109, %p110
      %s112 = ssub.s32 %s22, %s29
      %p113 = scmp.eq.s32.totalorder %s112, 0
      %s115 = sadd.s32 %s114, 1
      %s116 = scalar_select %p113, %s114, %s115
      %p119 = pneg %p113
      %p120 = scmp.eq.s32.totalorder %s14, 1
      %p121 = por %p119, %p120
      %p122 = scmp.ne.s32.totalorder %s114, %s117
      %p123 = scmp.eq.s32.totalorder %s14, 0
      %p124 = por %p122, %p123
      %p125 = scmp.ne.s32.totalorder %s114, %s117
      %p126 = scmp.eq.s32.totalorder %s19, 1
      %p127 = por %p125, %p126
      %p128 = scmp.ne.s32.totalorder %s117, %s118
      %p129 = scmp.eq.s32.totalorder %s19, 0
      %p130 = por %p128, %p129
      %p131 = scmp.ne.s32.totalorder %s117, %s118
      %p132 = scmp.eq.s32.totalorder %s20, 1
      %p133 = por %p131, %p132
      %p135 = scmp.ne.s32.totalorder %s118, %s134
      %p136 = scmp.eq.s32.totalorder %s20, 0
      %p137 = por %p135, %p136
      %s139 = sadd.s32 %s138, 1
      %p142 = scmp.eq.s32.totalorder %s14, 1
      %p143 = scmp.ne.s32.totalorder %s138, %s140
      %p144 = scmp.eq.s32.totalorder %s14, 0
      %p145 = por %p143, %p144
      %p146 = scmp.ne.s32.totalorder %s138, %s140
      %p147 = scmp.eq.s32.totalorder %s19, 1
      %p148 = por %p146, %p147
      %p149 = scmp.ne.s32.totalorder %s140, %s141
      %p150 = scmp.eq.s32.totalorder %s19, 0
      %p151 = por %p149, %p150
      %p152 = scmp.ne.s32.totalorder %s140, %s141
      %p153 = scmp.eq.s32.totalorder %s20, 1
      %p154 = por %p152, %p153
      %p156 = scmp.ne.s32.totalorder %s141, %s155
      %p157 = scmp.eq.s32.totalorder %s20, 0
      %p158 = por %p156, %p157
      %s159 = ssub.s32 %s21, %s33
      %p160 = scmp.eq.s32.totalorder %s159, 0
      %s162 = sadd.s32 %s161, 1
      %s163 = scalar_select %p160, %s161, %s162
      %p166 = pneg %p160
      %p167 = scmp.eq.s32.totalorder %s14, 1
      %p168 = por %p166, %p167
      %p169 = scmp.ne.s32.totalorder %s161, %s164
      %p170 = scmp.eq.s32.totalorder %s14, 0
      %p171 = por %p169, %p170
      %p172 = scmp.ne.s32.totalorder %s161, %s164
      %p173 = scmp.eq.s32.totalorder %s19, 1
      %p174 = por %p172, %p173
      %p175 = scmp.ne.s32.totalorder %s164, %s165
      %p176 = scmp.eq.s32.totalorder %s19, 0
      %p177 = por %p175, %p176
      %p178 = scmp.ne.s32.totalorder %s164, %s165
      %p179 = scmp.eq.s32.totalorder %s20, 1
      %p180 = por %p178, %p179
      %p182 = scmp.ne.s32.totalorder %s165, %s181
      %p183 = scmp.eq.s32.totalorder %s20, 0
      %p184 = por %p182, %p183
      %p185 = scmp.le.s32.totalorder 1, %s14
      %p186 = scmp.lt.s32.totalorder %s14, 3
      %p187 = pnand %p185, %p186
      %p188 = pneg %p187
      // Predicated region
      $region9: #{tpu_custom_call.1} parent=5 // pred_check
        _
      $region10: #{tpu_custom_call.1} parent=5 // pred_check_branch
        %190 = sbr.rel (%p187) target = $region12
      $region11: #{tpu_custom_call.1} parent=5 // pred_region
        %s191 = ssub.s32 %s14, 1
        // Predicated region
        $region13: #{tpu_custom_call.1} parent=11 // pred_check
          %p192 = pneg %p78
        $region14: #{tpu_custom_call.1} parent=11 // pred_check_branch
          %194 = sbr.rel (%p192) target = $region16
        $region15: #{tpu_custom_call.1} parent=11 // pred_region
          %p195 = scmp.lt.s32.totalorder %s24, 0
          %s196 = scalar_select %p195, %s24, 0
          %s197 = smul.addr %s196, 8
          %s198 = scalar_lea.vmem %s1, %s197
        $region16: #{tpu_custom_call.1} parent=11 // pred_fallthru
          _
        // Predicated region
        $region17: #{tpu_custom_call.1} parent=11 // pred_check
          %p199 = pneg %p104
        $region18: #{tpu_custom_call.1} parent=11 // pred_check_branch
          %201 = sbr.rel (%p199) target = $region20
        $region19: #{tpu_custom_call.1} parent=11 // pred_region
          %p202 = scmp.lt.s32.totalorder %s24, 0
          %s203 = scalar_select %p202, %s24, 0
          %s204 = scalar_lea.vmem %s2, %s203
        $region20: #{tpu_custom_call.1} parent=11 // pred_fallthru
          _
        // Predicated region
        $region21: #{tpu_custom_call.1} parent=11 // pred_check
          %p205 = pneg %p130
        $region22: #{tpu_custom_call.1} parent=11 // pred_check_branch
          %207 = sbr.rel (%p205) target = $region24
        $region23: #{tpu_custom_call.1} parent=11 // pred_region
          %s208 = smul.u32 16, %s24
          %p209 = scmp.lt.s32.totalorder %s208, 15
          %s210 = scalar_select %p209, %s208, 15
          %s211 = smul.addr %s210, 8
          %s212 = scalar_lea.vmem %s3, %s211
          %s213 = smul.u32 16, %s24
        $region24: #{tpu_custom_call.1} parent=11 // pred_fallthru
          _
        // Predicated region
        $region25: #{tpu_custom_call.1} parent=11 // pred_check
          %p214 = pneg %p151
        $region26: #{tpu_custom_call.1} parent=11 // pred_check_branch
          %216 = sbr.rel (%p214) target = $region28
        $region27: #{tpu_custom_call.1} parent=11 // pred_region
          _
        $region28: #{tpu_custom_call.1} parent=11 // pred_fallthru
          _
      $region12: #{tpu_custom_call.1} parent=5 // pred_fallthru
        _
      %p217 = scmp.lt.s32.totalorder %s14, 2
      // Predicated region
      $region29: #{tpu_custom_call.1} parent=5 // pred_check
        %p218 = pneg %p217
      $region30: #{tpu_custom_call.1} parent=5 // pred_check_branch
        %220 = sbr.rel (%p218) target = $region32
      $region31: #{tpu_custom_call.1} parent=5 // pred_region
        // Predicated region
        $region33: #{tpu_custom_call.1} parent=31 // pred_check
          %p221 = pneg %p46
        $region34: #{tpu_custom_call.1} parent=31 // pred_check_branch
          %223 = sbr.rel (%p221) target = $region36
        $region35: #{tpu_custom_call.1} parent=31 // pred_region
          %p224 = scmp.lt.s32.totalorder %s21, 1
          %s225 = scalar_select %p224, %s21, 1
          %s226 = smul.addr %s225, 8
          %s227 = scalar_lea.vmem %s0, %s226
        $region36: #{tpu_custom_call.1} parent=31 // pred_fallthru
          _
      $region32: #{tpu_custom_call.1} parent=5 // pred_fallthru
        _
      %p228 = scmp.le.s32.totalorder 1, %s14
      %p229 = scmp.lt.s32.totalorder %s14, 3
      %p230 = pnand %p228, %p229
      %p231 = pneg %p230
      // Predicated region
      $region37: #{tpu_custom_call.1} parent=5 // pred_check
        _
      $region38: #{tpu_custom_call.1} parent=5 // pred_check_branch
        %233 = sbr.rel (%p230) target = $region40
      $region39: #{tpu_custom_call.1} parent=5 // pred_region
        %s234 = ssub.s32 %s14, 1
        %p235 = scmp.lt.s32.totalorder %s23, 1
        %s236 = scalar_select %p235, %s23, 1
        %s237 = smul.addr %s236, 8
        %s238 = scalar_lea.vmem %s0, %s237
        %p239 = pneg %p52
        %p240 = pneg %p49
        %p241 = scmp.lt.s32.totalorder %s24, 0
        %s242 = scalar_select %p241, %s24, 0
        %s243 = smul.addr %s242, 8
        %s244 = scalar_lea.vmem %s1, %s243
        %p245 = pneg %p78
        %p246 = pneg %p75
        %p247 = scmp.lt.s32.totalorder %s24, 0
        %s248 = scalar_select %p247, %s24, 0
        %s249 = scalar_lea.vmem %s2, %s248
        %p250 = pneg %p104
        %p251 = pneg %p101
        %s252 = smul.u32 16, %s24
        %p253 = scmp.lt.s32.totalorder %s252, 15
        %s254 = scalar_select %p253, %s252, 15
        %s255 = smul.addr %s254, 8
        %s256 = scalar_lea.vmem %s3, %s255
        %p257 = pneg %p130
        %p258 = pneg %p127
        %p259 = pneg %p151
        %p260 = pneg %p148
        %p261 = pneg %p177
        %p262 = pneg %p174
        %s263 = sand.u32 %s164, 1
        %s264 = scalar_lea.sflag [#allocation4], %s263
        %s265 = sand.u32 %s164, 1
        %s266 = smul.addr %s265, 8
        %s267 = scalar_lea.vmem [#allocation3], %s266
        %p268 = scmp.lt.s32.totalorder %s23, 1
        %s269 = scalar_select %p268, %s23, 1
        %s270 = smul.addr %s269, 8
        %s271 = scalar_lea.vmem %s0, %s270
        %p272 = scmp.lt.s32.totalorder %s24, 0
        %s273 = scalar_select %p272, %s24, 0
        %s274 = smul.addr %s273, 8
        %s275 = scalar_lea.vmem %s1, %s274
        %p276 = scmp.lt.s32.totalorder %s24, 0
        %s277 = scalar_select %p276, %s24, 0
        %s278 = scalar_lea.vmem %s2, %s277
        %s279 = smul.u32 16, %s24
        %p280 = scmp.lt.s32.totalorder %s279, 15
        %s281 = scalar_select %p280, %s279, 15
        %s282 = smul.addr %s281, 8
        %s283 = scalar_lea.vmem %s3, %s282
        %s284 = smul.u32 16, %s24
        %p285 = scmp.eq.s32.totalorder %s24, 0
        // Predicated region
        $region41: #{tpu_custom_call.1} parent=39 // pred_check
          %p286 = pneg %p285
        $region42: #{tpu_custom_call.1} parent=39 // pred_check_branch
          %288 = sbr.rel (%p286) target = $region44
        $region43: #{tpu_custom_call.1} parent=39 // pred_region
          %vm289 = vcmask 261120
          %290 = vst.msk [vmem:[#allocation2] sm:$0xff] %vm289, 0.0
        $region44: #{tpu_custom_call.1} parent=39 // pred_fallthru
          _
        %v291 = vld [vmem:[%s275] sm:$0xff]
        %v292 = vld [vmem:[%s275 + $0x8] sm:$0xff]
        %v293 = vld [vmem:[%s275 + $0x10] sm:$0xff]
        %v294 = vld [vmem:[%s275 + $0x18] sm:$0xff]
        %v295 = vld [vmem:[%s278] sm:$0x1]
        %v296 = vld [vmem:[%s283] sm:$0xff]
        %v297 = vld [vmem:[%s283 + $0x8] sm:$0xff]
        %v298 = vld [vmem:[%s283 + $0x10] sm:$0xff]
        %v299 = vld [vmem:[%s283 + $0x18] sm:$0xff]
        %v300 = vld [vmem:[%s283 + $0x20] sm:$0xff]
        %v301 = vld [vmem:[%s283 + $0x28] sm:$0xff]
        %v302 = vld [vmem:[%s283 + $0x30] sm:$0xff]
        %v303 = vld [vmem:[%s283 + $0x38] sm:$0xff]
        %v304 = vld [vmem:[%s283 + $0x40] sm:$0xff]
        %v305 = vld [vmem:[%s283 + $0x48] sm:$0xff]
        %v306 = vld [vmem:[%s283 + $0x50] sm:$0xff]
        %v307 = vld [vmem:[%s283 + $0x58] sm:$0xff]
        %v308 = vld [vmem:[%s283 + $0x60] sm:$0xff]
        %v309 = vld [vmem:[%s283 + $0x68] sm:$0xff]
        %v310 = vld [vmem:[%s283 + $0x70] sm:$0xff]
        %v311 = vld [vmem:[%s283 + $0x78] sm:$0xff]
        %v312 = vld [vmem:[%s271] sm:$0xff]
        %v314 = vperm.slane %v295, 0
        %vm316 = vcmask 261120
        %v318 = vsel %vm316, %v312, 0
        %320 = vmatpush.msra.mxu0 0.0
        %321 = vmatpush.msra.mxu0 0.0
        %322 = vmatpush.msra.mxu0 0.0
        %323 = vmatpush.msra.mxu0 0.0
        %324 = vmatpush.msra.mxu0 0.0
        %325 = vmatpush.msra.mxu0 0.0
        %326 = vmatpush.msra.mxu0 0.0
        %327 = vmatpush.msra.mxu0 0.0
        %328 = vmatpush.msra.mxu0 0.0
        %329 = vmatpush.msra.mxu0 0.0
        %330 = vmatpush.msra.mxu0 0.0
        %331 = vmatpush.msra.mxu0 0.0
        %332 = vmatpush.msra.mxu0 %v294
        %333 = vmatpush.msra.mxu0 %v293
        %334 = vmatpush.msra.mxu0 %v292
        %335 = vmatpush.msra.mxu0 %v291
        %336 = vmatmul.f32.gmra.mxu0 %v318
        %v337 = vpop.f32.mrf.mxu0
        %v338 = vadd.f32 %v314, %v337
        %339 = vdwg.mxu0
        %v340 = vmax.f32 %v338, 0.0
        %v341 = vld [vmem:[#allocation2] sm:$0xff]
        %342 = vmatpush.msra.mxu0 %v311
        %343 = vmatpush.msra.mxu0 %v310
        %344 = vmatpush.msra.mxu0 %v309
        %345 = vmatpush.msra.mxu0 %v308
        %346 = vmatpush.msra.mxu0 %v307
        %347 = vmatpush.msra.mxu0 %v306
        %348 = vmatpush.msra.mxu0 %v305
        %349 = vmatpush.msra.mxu0 %v304
        %350 = vmatpush.msra.mxu0 %v303
        %351 = vmatpush.msra.mxu0 %v302
        %352 = vmatpush.msra.mxu0 %v301
        %353 = vmatpush.msra.mxu0 %v300
        %354 = vmatpush.msra.mxu0 %v299
        %355 = vmatpush.msra.mxu0 %v298
        %356 = vmatpush.msra.mxu0 %v297
        %357 = vmatpush.msra.mxu0 %v296
        %358 = vmatmul.f32.gmra.mxu0 %v340
        %v359 = vpop.f32.mrf.mxu0
        %v360 = vadd.f32 0.0, %v359
        %361 = vdwg.mxu0
        %v362 = vadd.f32 %v341, %v360
        %363 = vst.msk [vmem:[#allocation2] sm:$0xff] %vm316, %v362
        // Predicated region
        $region45: #{tpu_custom_call.1} parent=39 // pred_check
          %p364 = pneg %p285
        $region46: #{tpu_custom_call.1} parent=39 // pred_check_branch
          %366 = sbr.rel (%p364) target = $region48
        $region47: #{tpu_custom_call.1} parent=39 // pred_region
          %v367 = vld [vmem:[#allocation2] sm:$0xff]
          %v368 = vld [vmem:[%s4] sm:$0x1]
          %v370 = vperm.slane %v368, 0
          %v372 = vadd.f32 %v367, %v370
          %373 = vst.msk [vmem:[%s267] sm:$0xff] %vm316, %v372
        $region48: #{tpu_custom_call.1} parent=39 // pred_fallthru
          _
        %s374 = sand.u32 %s164, 1
        %s375 = scalar_lea.sflag [#allocation4], %s374
        %s376 = sand.u32 %s164, 1
        %s377 = smul.addr %s376, 8
        %s378 = scalar_lea.vmem [#allocation3], %s377
        // Predicated region
        $region49: #{tpu_custom_call.1} parent=39 // pred_check
          %p379 = pneg %p174
        $region50: #{tpu_custom_call.1} parent=39 // pred_check_branch
          %381 = sbr.rel (%p379) target = $region52
        $region51: #{tpu_custom_call.1} parent=39 // pred_region
          %383 = vsyncadd %s375, 0
          %s384 = smul.addr %s23, 8
          %s385 = scalar_lea.hbm %s5, %s384
          %s387 = sshll.u32 %s378, 4
          %s388 = int_to_ptr.vmem [resolvable:$true] %s387
          %s389 = sshll.u32 %s385, 4
          %s390 = int_to_ptr.hbm [resolvable:$true] %s389
          %392 = dma.vmem_to_hbm [thread:$0]  %s388, 128, %s390, %s375
        $region52: #{tpu_custom_call.1} parent=39 // pred_fallthru
          _
      $region40: #{tpu_custom_call.1} parent=5 // pred_fallthru
        _
      %p393 = scmp.le.s32.totalorder 2, %s14
      // Predicated region
      $region53: #{tpu_custom_call.1} parent=5 // pred_check
        %p394 = pneg %p393
      $region54: #{tpu_custom_call.1} parent=5 // pred_check_branch
        %396 = sbr.rel (%p394) target = $region56
      $region55: #{tpu_custom_call.1} parent=5 // pred_region
        %s397 = ssub.s32 %s14, 2
        // Predicated region
        $region57: #{tpu_custom_call.1} parent=55 // pred_check
          %p398 = pneg %p180
        $region58: #{tpu_custom_call.1} parent=55 // pred_check_branch
          %400 = sbr.rel (%p398) target = $region60
        $region59: #{tpu_custom_call.1} parent=55 // pred_region
          %s401 = sand.u32 %s165, 1
          %s402 = scalar_lea.sflag [#allocation4], %s401
          %s403 = sand.u32 %s165, 1
          %s404 = smul.addr %s403, 8
          %s405 = scalar_lea.vmem [#allocation3], %s404
          %407 = dma.done %s402, 128
        $region60: #{tpu_custom_call.1} parent=55 // pred_fallthru
          _
      $region56: #{tpu_custom_call.1} parent=5 // pred_fallthru
        _
    $region6: #{tpu_custom_call.1} parent=1 // loop_footer
      %s18 = sadd.s32 1, %s14
    $region7: #{tpu_custom_call.1} parent=1 // loop_footer_branch
      %13 = sbr.rel target = $region3
    $region8: #{tpu_custom_call.1} parent=1 // loop_exit
      _
    %408 = vsyncpa [#allocation4], 1
    %s409 = scalar_lea.sflag [#allocation4], 1
    %410 = vsyncpa %s409, 1

</llo_original>
